<compile_context>
chip_gen: v7x
topology: tpu7x:2x2x1
jax: 0.10.0
libtpu: 0.0.40
codegen_flags: <defaults>
</compile_context>

<pallas_src>
import math
from typing import Dict, List, Optional

import jax
import jax.numpy as jnp
from jax.experimental import pallas as pl
from jax.experimental.pallas import tpu as pltpu


def _round_up(x: int, m: int) -> int:
    return (x + m - 1) // m * m


# ----------------------------- Pallas kernel -------------------------------
def _make_fused_linear_kernel(n_parts: int):
    """Kernel: o = bias + sum_i x_i @ W_i, accumulated directly into o_ref."""

    def kernel(*refs):
        x_refs = refs[:n_parts]
        w_refs = refs[n_parts:2 * n_parts]
        b_ref = refs[2 * n_parts]
        o_ref = refs[2 * n_parts + 1]

        if n_parts == 0:
            # All concat columns came from the constant MultiOutputNetwork and
            # were folded into the bias: output is a bias broadcast.
            o_ref[...] = jnp.broadcast_to(b_ref[...], o_ref.shape).astype(o_ref.dtype)
            return

        # Ref-based accumulation keeps vreg pressure bounded at large tiles.
        o_ref[...] = (b_ref[...] + jnp.dot(x_refs[0][...], w_refs[0][...],
                                           preferred_element_type=jnp.float32)
                      ).astype(o_ref.dtype)
        for x_ref, w_ref in zip(x_refs[1:], w_refs[1:]):
            o_ref[...] += jnp.dot(x_ref[...], w_ref[...],
                                  preferred_element_type=jnp.float32)

    return kernel


def fused_linear(
    x_groups: List[jax.Array],     # each (B, K_g), compute dtype (bf16/f32)
    w_groups: List[jax.Array],     # each (K_g, DOUT_PAD), compute dtype
    b_eff: jax.Array,              # (1, DOUT_PAD) f32, constants folded in
    d_out: int,
    batch_size: int,
    *,
    tile_b: int = 512,
) -> jax.Array:
    """y[:, :d_out] = concat(x_groups) @ concat(w_groups) + b_eff via Pallas."""
    n = len(x_groups)
    B = int(batch_size)
    dout_pad = b_eff.shape[1]
    ks = [int(w.shape[0]) for w in w_groups]
    k_total = sum(ks)

    # ---- batch tile: multiple of 16 (bf16 sublane packing), large default,
    # capped at ceil(B/2) so the batch grid has >=2 steps for v7x's 2 TCs.
    half_b = _round_up(max(1, (B + 1) // 2), 16)
    tb = max(16, min(_round_up(int(tile_b), 16), half_b))
    b_pad = _round_up(B, tb)
    if b_pad != B and n > 0:
        x_groups = [jnp.pad(x, ((0, b_pad - B), (0, 0))) for x in x_groups]

    # ---- Dout tile: keep the (tb, td) f32 accumulator/output block bounded.
    td = dout_pad if dout_pad <= 512 else 128     # dout_pad is a mult. of 128
    grid = (b_pad // tb, dout_pad // td)
    weights_resident = grid[1] == 1               # W/bias index_map == (0, 0)

    in_bytes = x_groups[0].dtype.itemsize if n else 4
    w_bytes = w_groups[0].dtype.itemsize if n else 4

    # ---- explicit VMEM budget (conservative: everything double-buffered).
    # v7x has only 64 MiB physical VMEM (32 MiB scoped default), v5e's scoped
    # default is 16 MiB, so we size the limit from actual usage + headroom.
    vmem_est = (2 * in_bytes * tb * k_total          # x groups
                + 2 * w_bytes * k_total * td         # W groups
                + 2 * 4 * td                         # bias
                + 2 * 4 * tb * td)                   # output
    vmem_limit = int(min(112 * 2**20, max(16 * 2**20, 2 * vmem_est)))

    cost = pl.CostEstimate(
        flops=2 * b_pad * k_total * dout_pad,
        transcendentals=0,
        bytes_accessed=(in_bytes * b_pad * k_total
                        + w_bytes * k_total * dout_pad
                        + 4 * dout_pad
                        + 4 * b_pad * dout_pad),
    )

    out_spec = pl.BlockSpec((tb, td), lambda i, j: (i, j))

    def build_in_specs(single_buffer_weights: bool):
        # Grid-invariant weights/bias can be single-buffered (halves their
        # resident VMEM); x and output keep default double-buffering.
        wk = ({"pipeline_mode": pl.Buffered(1)}
              if (single_buffer_weights and weights_resident) else {})
        return (
            [pl.BlockSpec((tb, k), lambda i, j: (i, 0)) for k in ks]          # x
            + [pl.BlockSpec((k, td), lambda i, j: (0, j), **wk) for k in ks]  # W
            + [pl.BlockSpec((1, td), lambda i, j: (0, j), **wk)]              # b
        )

    def call(in_specs):
        return pl.pallas_call(
            _make_fused_linear_kernel(n),
            out_shape=jax.ShapeDtypeStruct((b_pad, dout_pad), jnp.float32),
            grid=grid,
            in_specs=in_specs,
            out_specs=out_spec,
            compiler_params=pltpu.CompilerParams(
                dimension_semantics=("parallel", "parallel"),
                vmem_limit_bytes=vmem_limit),
            cost_estimate=cost,
        )(*x_groups, *w_groups, b_eff)

    try:
        # Preferred path: single-buffered resident weights/bias.
        out = jax.block_until_ready(call(build_in_specs(True)))
    except Exception:
        # Fallback for jax versions where pipeline_mode=pl.Buffered(1) is not
        # accepted at the top-level pallas_call: identical semantics, default
        # double-buffering.
        out = call(build_in_specs(False))

    # Slice only when padding was actually introduced (keeps the common
    # aligned case free of an extra HBM copy).
    if b_pad == B and dout_pad == d_out:
        return out
    return out[:B, :d_out]


# --------------------------- Module equivalents -----------------------------
class MultiOutputNetworkJax:
    """JAX equivalent of MultiOutputNetwork (constant `dim`-filled outputs)."""

    def __init__(self, outputs: Dict[str, int]):
        self.output_dims = dict(outputs)
        self.output_order = sorted(self.output_dims.keys())

    def __call__(self, inputs: List[jax.Array]) -> List[jax.Array]:
        batch_size = inputs[0].shape[0]
        outs = {
            name: jnp.full((batch_size, dim), float(dim), dtype=jnp.float32)
            for name, dim in self.output_dims.items()
        }
        return [outs[name] for name in self.output_order]

    def get_names_order(self) -> List[str]:
        return self.output_order[:]

    def get_output_dims(self) -> Dict[str, int]:
        return self.output_dims.copy()


class FeatureOrderHolderJax:
    def __init__(self, feature_order: List[str]):
        self._ids = {name: i for i, name in enumerate(feature_order)}

    def get_ids(self, features: List[str]) -> List[int]:
        return [self._ids[f] for f in features]


class LinearWithEmbeddingModelInputsJax:
    """JAX/Pallas equivalent of LinearWithEmbeddingModelInputs.

    The Linear weight's column layout follows the PyTorch forward's concat:
      [selected features in `features` order] + [multi-output names, sorted].
    Constant multi-output contributions are folded into the bias (f32, exact);
    selected features are grouped into >=128-wide contraction slabs.
    """

    def __init__(
        self,
        weight: jax.Array,                     # (Dout, Din), PyTorch Linear convention
        bias: jax.Array,                       # (Dout,)
        feature_holder: FeatureOrderHolderJax,
        features: List[str],
        feature_dims: Dict[str, int],          # per-feature widths (static, known at deploy)
        multi_out_subnetwork: Optional[MultiOutputNetworkJax] = None,
        compute_dtype=jnp.bfloat16,            # matmul operand dtype (f32 acc kept)
    ):
        d_out, d_in = weight.shape
        self.d_out = int(d_out)
        self.feature_holder = feature_holder
        self.features = list(features)
        self.multi_out_subnetwork = multi_out_subnetwork
        self.compute_dtype = compute_dtype

        w_t = jnp.transpose(weight).astype(jnp.float32)   # (Din, Dout)

        # Lane padding for Dout: skip when already a multiple of 128 (so the
        # post-kernel slice is the identity); otherwise pad for unmasked vst.
        if self.d_out % 128 == 0:
            dout_pad = self.d_out
        else:
            dout_pad = _round_up(max(self.d_out, 128), 128)
        pad_cols = dout_pad - self.d_out
        self.dout_pad = dout_pad

        # Group selected features so each matmul contraction is >=128 wide.
        self.feature_groups: List[List[str]] = []
        cur, cur_k = [], 0
        for name in self.features:
            cur.append(name)
            cur_k += int(feature_dims[name])
            if cur_k >= 128:
                self.feature_groups.append(cur)
                cur, cur_k = [], 0
        if cur:
            self.feature_groups.append(cur)

        # Split W^T along Din into per-group slabs (concat order == features
        # order), lane-pad Dout, cast matmul operand to compute_dtype.
        self.w_groups: List[jax.Array] = []
        off = 0
        for grp in self.feature_groups:
            k_g = sum(int(feature_dims[n]) for n in grp)
            slab = jnp.pad(w_t[off:off + k_g, :], ((0, 0), (0, pad_cols)))
            self.w_groups.append(slab.astype(compute_dtype))
            off += k_g

        # Fold the constant multi-output blocks into the bias (exact f32):
        # each block contributes dim * sum(W^T[rows_of_block, :], axis=0).
        b_eff = bias.astype(jnp.float32)
        if multi_out_subnetwork is not None:
            for name in multi_out_subnetwork.output_order:
                dim = int(multi_out_subnetwork.output_dims[name])
                b_eff = b_eff + float(dim) * jnp.sum(w_t[off:off + dim, :], axis=0)
                off += dim
        assert off == d_in, "weight Din must equal total concat width"
        self.b_eff = jnp.pad(b_eff.reshape(1, -1), ((0, 0), (0, pad_cols)))

    def get_out_features(self) -> int:
        return self.d_out

    def __call__(self, inputs: List[jax.Array], *, tile_b: int = 512) -> jax.Array:
        batch = inputs[0].shape[0]
        ids = self.feature_holder.get_ids(self.features)
        id_of = dict(zip(self.features, ids))
        # Per-group concat of the selected inputs (cheap, small) + bf16 cast;
        # no full HBM concat of the whole Din and no constant materialization.
        x_groups: List[jax.Array] = []
        for grp in self.feature_groups:
            parts = [inputs[id_of[n]] for n in grp]
            x = parts[0] if len(parts) == 1 else jnp.concatenate(parts, axis=1)
            x_groups.append(x.astype(self.compute_dtype))
        return fused_linear(x_groups, self.w_groups, self.b_eff, self.d_out,
                            batch, tile_b=tile_b)


# ---------------------------------- main ------------------------------------
if __name__ == "__main__":
    key = jax.random.PRNGKey(0)
    keys = jax.random.split(key, 8)

    # Small, forward-consistent shapes.
    batch = 64
    feat_dims = {"dense_a": 16, "dense_b": 24, "dense_c": 104, "dense_d": 32}
    feature_order = ["dense_a", "dense_b", "dense_c", "dense_d"]     # input order
    features = ["dense_c", "dense_b", "dense_a", "dense_d"]          # selection order
    multi_out_dims = {"sub_x": 8, "sub_y": 16}
    d_in = sum(feat_dims.values()) + sum(multi_out_dims.values())    # 200
    d_out = 32

    inputs = [
        jax.random.normal(keys[i], (batch, feat_dims[name]), dtype=jnp.float32)
        for i, name in enumerate(feature_order)
    ]

    # Deterministic Linear params (PyTorch-style uniform init bounds).
    bound = 1.0 / math.sqrt(d_in)
    weight = jax.random.uniform(keys[4], (d_out, d_in), jnp.float32, -bound, bound)
    bias = jax.random.uniform(keys[5], (d_out,), jnp.float32, -bound, bound)

    multi_out = MultiOutputNetworkJax(multi_out_dims)
    holder = FeatureOrderHolderJax(feature_order)

    # Pure-JAX reference of the ORIGINAL forward (explicit concat + full W).
    extra = multi_out(inputs)
    sel = [inputs[i] for i in holder.get_ids(features)]
    x_cat = jnp.concatenate(sel + extra, axis=1)
    ref = jnp.dot(x_cat, weight.T, precision=jax.lax.Precision.HIGHEST) + bias

    # (1) f32 compute path: tight check of kernel structure
    #     (feature grouping, bias folding, batch/Dout tiling, ref accumulation).
    model_f32 = LinearWithEmbeddingModelInputsJax(
        weight, bias, holder, features, feat_dims, multi_out,
        compute_dtype=jnp.float32)
    out_f32 = jax.block_until_ready(model_f32(inputs))
    assert out_f32.shape == (batch, d_out)
    assert jnp.allclose(out_f32, ref, atol=1e-4, rtol=1e-5)

    # (2) bf16 compute path (production default, HBM-bandwidth win):
    #     loosened tolerance for bf16 operands (f32 accumulate, f32 bias).
    model_bf16 = LinearWithEmbeddingModelInputsJax(
        weight, bias, holder, features, feat_dims, multi_out,
        compute_dtype=jnp.bfloat16)
    out_bf16 = jax.block_until_ready(model_bf16(inputs))
    assert out_bf16.shape == (batch, d_out)
    assert jnp.allclose(out_bf16, ref, atol=5e-2, rtol=2e-2)

    # (3) Edge case from review: no selected features -> pure constant path
    #     (n_parts == 0 bias-broadcast kernel, everything folded into bias).
    d_in_const = sum(multi_out_dims.values())
    w_const = jax.random.uniform(keys[6], (d_out, d_in_const), jnp.float32, -bound, bound)
    b_const = jax.random.uniform(keys[7], (d_out,), jnp.float32, -bound, bound)
    model_const = LinearWithEmbeddingModelInputsJax(
        w_const, b_const, holder, [], feat_dims, multi_out,
        compute_dtype=jnp.bfloat16)
    out_const = jax.block_until_ready(model_const(inputs))
    ref_const = jnp.dot(jnp.concatenate(extra, axis=1), w_const.T,
                        precision=jax.lax.Precision.HIGHEST) + b_const
    assert jnp.allclose(out_const, ref_const, atol=1e-4, rtol=1e-5)

    print("KERNEL_OK")
</pallas_src>

<mosaic_0001>
module attributes {stable_mosaic.version = 11 : i64} {
  func.func @kernel(%arg0: i32, %arg1: i32, %arg2: memref<32x128xf32, #tpu.memory_space<vmem>>, %arg3: memref<32x48xf32, #tpu.memory_space<vmem>>, %arg4: memref<128x128xf32, #tpu.memory_space<vmem>>, %arg5: memref<48x128xf32, #tpu.memory_space<vmem>>, %arg6: memref<1x128xf32, #tpu.memory_space<vmem>>, %arg7: memref<32x128xf32, #tpu.memory_space<vmem>>) attributes {dimension_semantics = [#tpu.dimension_semantics<parallel>, #tpu.dimension_semantics<parallel>], iteration_bounds = array<i64: 2, 1>, scalar_prefetch = 0 : i64, scratch_operands = 0 : i64, tpu.core_type = #tpu.core_type<tc>, window_params = [{transform_indices = @transform_0, window_bounds = array<i64: 32, 128>}, {transform_indices = @transform_1, window_bounds = array<i64: 32, 48>}, {pipeline_mode = #tpu.pipeline_mode<synchronous>, transform_indices = @transform_2, window_bounds = array<i64: 128, 128>}, {pipeline_mode = #tpu.pipeline_mode<synchronous>, transform_indices = @transform_3, window_bounds = array<i64: 48, 128>}, {pipeline_mode = #tpu.pipeline_mode<synchronous>, transform_indices = @transform_4, window_bounds = array<i64: 1, 128>}, {transform_indices = @transform_5, window_bounds = array<i64: 32, 128>}]} {
    %c0 = arith.constant 0 : index
    %c0_0 = arith.constant 0 : index
    %0 = vector.load %arg6[%c0, %c0_0] : memref<1x128xf32, #tpu.memory_space<vmem>>, vector<1x128xf32>
    %c0_1 = arith.constant 0 : index
    %c0_2 = arith.constant 0 : index
    %1 = vector.load %arg2[%c0_1, %c0_2] : memref<32x128xf32, #tpu.memory_space<vmem>>, vector<32x128xf32>
    %c0_3 = arith.constant 0 : index
    %c0_4 = arith.constant 0 : index
    %2 = vector.load %arg4[%c0_3, %c0_4] : memref<128x128xf32, #tpu.memory_space<vmem>>, vector<128x128xf32>
    %cst = arith.constant dense<0.000000e+00> : vector<32x128xf32>
    %3 = tpu.matmul %1, %2, %cst {dimension_numbers = #tpu.dot_dimension_numbers<[1], [0], [0], [1], [0, 0, 1, 1], [], []>} : vector<32x128xf32>, vector<128x128xf32>, vector<32x128xf32> -> vector<32x128xf32>
    %4 = vector.broadcast %0 : vector<1x128xf32> to vector<32x128xf32>
    %5 = arith.addf %4, %3 : vector<32x128xf32>
    %c0_5 = arith.constant 0 : index
    %c0_6 = arith.constant 0 : index
    %6 = vector.load %arg7[%c0_5, %c0_6] : memref<32x128xf32, #tpu.memory_space<vmem>>, vector<32x128xf32>
    tpu.vector_store %arg7[%c0_5, %c0_6], %5 {strides = array<i32>} : memref<32x128xf32, #tpu.memory_space<vmem>>, vector<32x128xf32>,
    %c0_7 = arith.constant 0 : index
    %c0_8 = arith.constant 0 : index
    %7 = vector.load %arg7[%c0_7, %c0_8] : memref<32x128xf32, #tpu.memory_space<vmem>>, vector<32x128xf32>
    %c0_9 = arith.constant 0 : index
    %c0_10 = arith.constant 0 : index
    %8 = vector.load %arg3[%c0_9, %c0_10] : memref<32x48xf32, #tpu.memory_space<vmem>>, vector<32x48xf32>
    %c0_11 = arith.constant 0 : index
    %c0_12 = arith.constant 0 : index
    %9 = vector.load %arg5[%c0_11, %c0_12] : memref<48x128xf32, #tpu.memory_space<vmem>>, vector<48x128xf32>
    %cst_13 = arith.constant dense<0.000000e+00> : vector<32x128xf32>
    %10 = tpu.matmul %8, %9, %cst_13 {dimension_numbers = #tpu.dot_dimension_numbers<[1], [0], [0], [1], [0, 0, 1, 1], [], []>} : vector<32x48xf32>, vector<48x128xf32>, vector<32x128xf32> -> vector<32x128xf32>
    %11 = arith.addf %7, %10 : vector<32x128xf32>
    %c0_14 = arith.constant 0 : index
    %c0_15 = arith.constant 0 : index
    %12 = vector.load %arg7[%c0_14, %c0_15] : memref<32x128xf32, #tpu.memory_space<vmem>>, vector<32x128xf32>
    tpu.vector_store %arg7[%c0_14, %c0_15], %11 {strides = array<i32>} : memref<32x128xf32, #tpu.memory_space<vmem>>, vector<32x128xf32>,
    return
  }
  func.func @transform_0(%arg0: i32, %arg1: i32) -> (i32, i32) {
    %c0_i32 = arith.constant 0 : i32
    %c0_i32_0 = arith.constant 0 : i32
    return %arg0, %c0_i32 : i32, i32
  }
  func.func @transform_1(%arg0: i32, %arg1: i32) -> (i32, i32) {
    %c0_i32 = arith.constant 0 : i32
    %c0_i32_0 = arith.constant 0 : i32
    return %arg0, %c0_i32 : i32, i32
  }
  func.func @transform_2(%arg0: i32, %arg1: i32) -> (i32, i32) {
    %c0_i32 = arith.constant 0 : i32
    %c0_i32_0 = arith.constant 0 : i32
    return %c0_i32, %arg1 : i32, i32
  }
  func.func @transform_3(%arg0: i32, %arg1: i32) -> (i32, i32) {
    %c0_i32 = arith.constant 0 : i32
    %c0_i32_0 = arith.constant 0 : i32
    return %c0_i32, %arg1 : i32, i32
  }
  func.func @transform_4(%arg0: i32, %arg1: i32) -> (i32, i32) {
    %c0_i32 = arith.constant 0 : i32
    %c0_i32_0 = arith.constant 0 : i32
    return %c0_i32, %arg1 : i32, i32
  }
  func.func @transform_5(%arg0: i32, %arg1: i32) -> (i32, i32) {
    %c0_i32 = arith.constant 0 : i32
    return %arg0, %arg1 : i32, i32
  }
}

module attributes {stable_mosaic.version = 11 : i64} {
  func.func @kernel(%arg0: i32, %arg1: i32, %arg2: memref<32x128xf32, #tpu.memory_space<vmem>>, %arg3: memref<32x48xf32, #tpu.memory_space<vmem>>, %arg4: memref<128x128xf32, #tpu.memory_space<vmem>>, %arg5: memref<48x128xf32, #tpu.memory_space<vmem>>, %arg6: memref<1x128xf32, #tpu.memory_space<vmem>>, %arg7: memref<32x128xf32, #tpu.memory_space<vmem>>) attributes {dimension_semantics = [#tpu.dimension_semantics<parallel>, #tpu.dimension_semantics<parallel>], iteration_bounds = array<i64: 2, 1>, scalar_prefetch = 0 : i64, scratch_operands = 0 : i64, tpu.core_type = #tpu.core_type<tc>, window_params = [{transform_indices = @transform_0, window_bounds = array<i64: 32, 128>}, {transform_indices = @transform_1, window_bounds = array<i64: 32, 48>}, {transform_indices = @transform_2, window_bounds = array<i64: 128, 128>}, {transform_indices = @transform_3, window_bounds = array<i64: 48, 128>}, {transform_indices = @transform_4, window_bounds = array<i64: 1, 128>}, {transform_indices = @transform_5, window_bounds = array<i64: 32, 128>}]} {
    %c0 = arith.constant 0 : index
    %c0_0 = arith.constant 0 : index
    %0 = vector.load %arg6[%c0, %c0_0] : memref<1x128xf32, #tpu.memory_space<vmem>>, vector<1x128xf32>
    %c0_1 = arith.constant 0 : index
    %c0_2 = arith.constant 0 : index
    %1 = vector.load %arg2[%c0_1, %c0_2] : memref<32x128xf32, #tpu.memory_space<vmem>>, vector<32x128xf32>
    %c0_3 = arith.constant 0 : index
    %c0_4 = arith.constant 0 : index
    %2 = vector.load %arg4[%c0_3, %c0_4] : memref<128x128xf32, #tpu.memory_space<vmem>>, vector<128x128xf32>
    %cst = arith.constant dense<0.000000e+00> : vector<32x128xf32>
    %3 = tpu.matmul %1, %2, %cst {dimension_numbers = #tpu.dot_dimension_numbers<[1], [0], [0], [1], [0, 0, 1, 1], [], []>} : vector<32x128xf32>, vector<128x128xf32>, vector<32x128xf32> -> vector<32x128xf32>
    %4 = vector.broadcast %0 : vector<1x128xf32> to vector<32x128xf32>
    %5 = arith.addf %4, %3 : vector<32x128xf32>
    %c0_5 = arith.constant 0 : index
    %c0_6 = arith.constant 0 : index
    %6 = vector.load %arg7[%c0_5, %c0_6] : memref<32x128xf32, #tpu.memory_space<vmem>>, vector<32x128xf32>
    tpu.vector_store %arg7[%c0_5, %c0_6], %5 {strides = array<i32>} : memref<32x128xf32, #tpu.memory_space<vmem>>, vector<32x128xf32>,
    %c0_7 = arith.constant 0 : index
    %c0_8 = arith.constant 0 : index
    %7 = vector.load %arg7[%c0_7, %c0_8] : memref<32x128xf32, #tpu.memory_space<vmem>>, vector<32x128xf32>
    %c0_9 = arith.constant 0 : index
    %c0_10 = arith.constant 0 : index
    %8 = vector.load %arg3[%c0_9, %c0_10] : memref<32x48xf32, #tpu.memory_space<vmem>>, vector<32x48xf32>
    %c0_11 = arith.constant 0 : index
    %c0_12 = arith.constant 0 : index
    %9 = vector.load %arg5[%c0_11, %c0_12] : memref<48x128xf32, #tpu.memory_space<vmem>>, vector<48x128xf32>
    %cst_13 = arith.constant dense<0.000000e+00> : vector<32x128xf32>
    %10 = tpu.matmul %8, %9, %cst_13 {dimension_numbers = #tpu.dot_dimension_numbers<[1], [0], [0], [1], [0, 0, 1, 1], [], []>} : vector<32x48xf32>, vector<48x128xf32>, vector<32x128xf32> -> vector<32x128xf32>
    %11 = arith.addf %7, %10 : vector<32x128xf32>
    %c0_14 = arith.constant 0 : index
    %c0_15 = arith.constant 0 : index
    %12 = vector.load %arg7[%c0_14, %c0_15] : memref<32x128xf32, #tpu.memory_space<vmem>>, vector<32x128xf32>
    tpu.vector_store %arg7[%c0_14, %c0_15], %11 {strides = array<i32>} : memref<32x128xf32, #tpu.memory_space<vmem>>, vector<32x128xf32>,
    return
  }
  func.func @transform_0(%arg0: i32, %arg1: i32) -> (i32, i32) {
    %c0_i32 = arith.constant 0 : i32
    %c0_i32_0 = arith.constant 0 : i32
    return %arg0, %c0_i32 : i32, i32
  }
  func.func @transform_1(%arg0: i32, %arg1: i32) -> (i32, i32) {
    %c0_i32 = arith.constant 0 : i32
    %c0_i32_0 = arith.constant 0 : i32
    return %arg0, %c0_i32 : i32, i32
  }
  func.func @transform_2(%arg0: i32, %arg1: i32) -> (i32, i32) {
    %c0_i32 = arith.constant 0 : i32
    %c0_i32_0 = arith.constant 0 : i32
    return %c0_i32, %arg1 : i32, i32
  }
  func.func @transform_3(%arg0: i32, %arg1: i32) -> (i32, i32) {
    %c0_i32 = arith.constant 0 : i32
    %c0_i32_0 = arith.constant 0 : i32
    return %c0_i32, %arg1 : i32, i32
  }
  func.func @transform_4(%arg0: i32, %arg1: i32) -> (i32, i32) {
    %c0_i32 = arith.constant 0 : i32
    %c0_i32_0 = arith.constant 0 : i32
    return %c0_i32, %arg1 : i32, i32
  }
  func.func @transform_5(%arg0: i32, %arg1: i32) -> (i32, i32) {
    %c0_i32 = arith.constant 0 : i32
    return %arg0, %arg1 : i32, i32
  }
}

</mosaic_0001>

<llo_original>
// kernel: tpu_custom_call.1
$region0: #{tpu_custom_call.1}
  #allocation0 [shape = 'u32[]', space=smem, size = 0x4, offset = 0x4, fixed_abs, tag = 'smem constant byte address 0x4 - core index']
  #allocation1 [shape = 'u32[144,128]{1,0:T(1,128)}', space=vmem, size = 0x12000, scoped, tag = 'internal scratch']
  %s0 = inlined_call_operand.vmem [shape: f32[64,128], index: 0, kind: input, shape index: {}]
  %s1 = inlined_call_operand.vmem [shape: f32[64,48], index: 1, kind: input, shape index: {}]
  %s2 = inlined_call_operand.hbm [shape: f32[128,128], index: 2, kind: input, shape index: {}]
  %s3 = inlined_call_operand.vmem [shape: f32[48,128], index: 3, kind: input, shape index: {}]
  %s4 = inlined_call_operand.vmem [shape: f32[1,128], index: 4, kind: input, shape index: {}]
  %s5 = inlined_call_operand.hbm [shape: f32[64,128], index: 5, kind: output, shape index: {}]
  %s6 = sld [smem:[#allocation0]]
  $region57: #{tpu_custom_call.1} parent=0
    _
  %s8 = ssub.s32 1, %s6
  %s9 = scalar_select 0, %s8, %s6
  $region1: #{tpu_custom_call.1} parent=0
    #allocation2 [shape = 'u8[65536]{0}', space=vmem, size = 0x10000, scoped, tag = 'input window, operand 2, single buffered']
    #allocation3 [shape = 's32[2]{0}', space=sflag, size = 0x8, scoped, tag = 'scoped memory for tpu_custom_call.1']
    #allocation4 [shape = 's32[2]{0}', space=sflag, size = 0x8, scoped, tag = 'scoped memory for tpu_custom_call.1']
    #allocation5 [shape = 'u8[32768]{0}', space=vmem, size = 0x8000, scoped, tag = 'output window, operand 0']
    %10 = vsyncpa [#allocation3], 0
    %11 = vsyncpa [#allocation4], 0
    %s12 = scalar_lea.sflag [#allocation4], 1
    %13 = vsyncpa %s12, 0
    loop: start=0, step=1, limit=4
    $region2: #{tpu_custom_call.1} parent=1 // loop_pre_header
      _
    $region3: #{tpu_custom_call.1} parent=1 // loop_header
      %s15 = sphi 0, %s19
      %p16 = scmp.ge.s32.totalorder %s15, 4
      %s22 = sphi 0, %s34
      %s23 = sphi 0, %s30
      %s24 = sphi 0, %s22
      %s25 = sphi 0, %s23
      %s26 = sphi 0, %s24
      %s27 = sphi 0, %s25
      %s37 = sphi 0, %s39
      %s40 = sphi 0, %s37
      %s41 = sphi 0, %s40
      %s57 = sphi 0, %s41
      %s63 = sphi 0, %s65
      %s66 = sphi 0, %s63
      %s67 = sphi 0, %s66
      %s83 = sphi 0, %s67
      %s89 = sphi 0, %s91
      %s92 = sphi 0, %s89
      %s93 = sphi 0, %s92
      %s109 = sphi 0, %s93
      %s115 = sphi 0, %s117
      %s118 = sphi 0, %s115
      %s119 = sphi 0, %s118
      %s135 = sphi 0, %s119
      %s141 = sphi 0, %s143
      %s144 = sphi 0, %s141
      %s145 = sphi 0, %s144
      %s161 = sphi 0, %s145
      %s169 = sphi 0, %s171
      %s172 = sphi 0, %s169
      %s173 = sphi 0, %s172
      %s189 = sphi 0, %s173
    $region4: #{tpu_custom_call.1} parent=1 // loop_header_branch
      %18 = sbr.rel (%p16) target = $region8
    $region5: #{tpu_custom_call.1} parent=1 // loop_body
      %s20 = ssub.s32 %s15, 1
      %s21 = ssub.s32 %s15, 2
      %s28 = sadd.s32 1, %s23
      %p29 = scmp.ge.s32.totalorder %s28, 1
      %s30 = scalar_select %p29, 0, %s28
      %s31 = sadd.s32 1, %s22
      %s32 = scalar_select %p29, %s31, %s22
      %p33 = scmp.ge.s32.totalorder %s32, 2
      %s34 = scalar_select %p33, 0, %s32
      %s35 = ssub.s32 %s22, %s34
      %p36 = scmp.eq.s32.totalorder %s35, 0
      %s38 = sadd.s32 %s37, 1
      %s39 = scalar_select %p36, %s37, %s38
      %p42 = pneg %p36
      %p43 = scmp.eq.s32.totalorder %s15, 1
      %p44 = por %p42, %p43
      %p45 = scmp.ne.s32.totalorder %s37, %s40
      %p46 = scmp.eq.s32.totalorder %s15, 0
      %p47 = por %p45, %p46
      %p48 = scmp.ne.s32.totalorder %s37, %s40
      %p49 = scmp.eq.s32.totalorder %s20, 1
      %p50 = por %p48, %p49
      %p51 = scmp.ne.s32.totalorder %s40, %s41
      %p52 = scmp.eq.s32.totalorder %s20, 0
      %p53 = por %p51, %p52
      %p54 = scmp.ne.s32.totalorder %s40, %s41
      %p55 = scmp.eq.s32.totalorder %s21, 1
      %p56 = por %p54, %p55
      %p58 = scmp.ne.s32.totalorder %s41, %s57
      %p59 = scmp.eq.s32.totalorder %s21, 0
      %p60 = por %p58, %p59
      %s61 = ssub.s32 %s22, %s34
      %p62 = scmp.eq.s32.totalorder %s61, 0
      %s64 = sadd.s32 %s63, 1
      %s65 = scalar_select %p62, %s63, %s64
      %p68 = pneg %p62
      %p69 = scmp.eq.s32.totalorder %s15, 1
      %p70 = por %p68, %p69
      %p71 = scmp.ne.s32.totalorder %s63, %s66
      %p72 = scmp.eq.s32.totalorder %s15, 0
      %p73 = por %p71, %p72
      %p74 = scmp.ne.s32.totalorder %s63, %s66
      %p75 = scmp.eq.s32.totalorder %s20, 1
      %p76 = por %p74, %p75
      %p77 = scmp.ne.s32.totalorder %s66, %s67
      %p78 = scmp.eq.s32.totalorder %s20, 0
      %p79 = por %p77, %p78
      %p80 = scmp.ne.s32.totalorder %s66, %s67
      %p81 = scmp.eq.s32.totalorder %s21, 1
      %p82 = por %p80, %p81
      %p84 = scmp.ne.s32.totalorder %s67, %s83
      %p85 = scmp.eq.s32.totalorder %s21, 0
      %p86 = por %p84, %p85
      %s87 = ssub.s32 %s23, %s30
      %p88 = scmp.eq.s32.totalorder %s87, 0
      %s90 = sadd.s32 %s89, 1
      %s91 = scalar_select %p88, %s89, %s90
      %p94 = pneg %p88
      %p95 = scmp.eq.s32.totalorder %s15, 1
      %p96 = por %p94, %p95
      %p97 = scmp.ne.s32.totalorder %s89, %s92
      %p98 = scmp.eq.s32.totalorder %s15, 0
      %p99 = por %p97, %p98
      %p100 = scmp.ne.s32.totalorder %s89, %s92
      %p101 = scmp.eq.s32.totalorder %s20, 1
      %p102 = por %p100, %p101
      %p103 = scmp.ne.s32.totalorder %s92, %s93
      %p104 = scmp.eq.s32.totalorder %s20, 0
      %p105 = por %p103, %p104
      %p106 = scmp.ne.s32.totalorder %s92, %s93
      %p107 = scmp.eq.s32.totalorder %s21, 1
      %p108 = por %p106, %p107
      %p110 = scmp.ne.s32.totalorder %s93, %s109
      %p111 = scmp.eq.s32.totalorder %s21, 0
      %p112 = por %p110, %p111
      %s113 = ssub.s32 %s23, %s30
      %p114 = scmp.eq.s32.totalorder %s113, 0
      %s116 = sadd.s32 %s115, 1
      %s117 = scalar_select %p114, %s115, %s116
      %p120 = pneg %p114
      %p121 = scmp.eq.s32.totalorder %s15, 1
      %p122 = por %p120, %p121
      %p123 = scmp.ne.s32.totalorder %s115, %s118
      %p124 = scmp.eq.s32.totalorder %s15, 0
      %p125 = por %p123, %p124
      %p126 = scmp.ne.s32.totalorder %s115, %s118
      %p127 = scmp.eq.s32.totalorder %s20, 1
      %p128 = por %p126, %p127
      %p129 = scmp.ne.s32.totalorder %s118, %s119
      %p130 = scmp.eq.s32.totalorder %s20, 0
      %p131 = por %p129, %p130
      %p132 = scmp.ne.s32.totalorder %s118, %s119
      %p133 = scmp.eq.s32.totalorder %s21, 1
      %p134 = por %p132, %p133
      %p136 = scmp.ne.s32.totalorder %s119, %s135
      %p137 = scmp.eq.s32.totalorder %s21, 0
      %p138 = por %p136, %p137
      %s139 = ssub.s32 %s23, %s30
      %p140 = scmp.eq.s32.totalorder %s139, 0
      %s142 = sadd.s32 %s141, 1
      %s143 = scalar_select %p140, %s141, %s142
      %p146 = pneg %p140
      %p147 = scmp.eq.s32.totalorder %s15, 1
      %p148 = por %p146, %p147
      %p149 = scmp.ne.s32.totalorder %s141, %s144
      %p150 = scmp.eq.s32.totalorder %s15, 0
      %p151 = por %p149, %p150
      %p152 = scmp.ne.s32.totalorder %s141, %s144
      %p153 = scmp.eq.s32.totalorder %s20, 1
      %p154 = por %p152, %p153
      %p155 = scmp.ne.s32.totalorder %s144, %s145
      %p156 = scmp.eq.s32.totalorder %s20, 0
      %p157 = por %p155, %p156
      %p158 = scmp.ne.s32.totalorder %s144, %s145
      %p159 = scmp.eq.s32.totalorder %s21, 1
      %p160 = por %p158, %p159
      %p162 = scmp.ne.s32.totalorder %s145, %s161
      %p163 = scmp.eq.s32.totalorder %s21, 0
      %p164 = por %p162, %p163
      %s165 = ssub.s32 %s22, %s34
      %s166 = ssub.s32 %s23, %s30
      %s167 = sor.u32 %s165, %s166
      %p168 = scmp.eq.s32.totalorder %s167, 0
      %s170 = sadd.s32 %s169, 1
      %s171 = scalar_select %p168, %s169, %s170
      %p174 = pneg %p168
      %p175 = scmp.eq.s32.totalorder %s15, 1
      %p176 = por %p174, %p175
      %p177 = scmp.ne.s32.totalorder %s169, %s172
      %p178 = scmp.eq.s32.totalorder %s15, 0
      %p179 = por %p177, %p178
      %p180 = scmp.ne.s32.totalorder %s169, %s172
      %p181 = scmp.eq.s32.totalorder %s20, 1
      %p182 = por %p180, %p181
      %p183 = scmp.ne.s32.totalorder %s172, %s173
      %p184 = scmp.eq.s32.totalorder %s20, 0
      %p185 = por %p183, %p184
      %p186 = scmp.ne.s32.totalorder %s172, %s173
      %p187 = scmp.eq.s32.totalorder %s21, 1
      %p188 = por %p186, %p187
      %p190 = scmp.ne.s32.totalorder %s173, %s189
      %p191 = scmp.eq.s32.totalorder %s21, 0
      %p192 = por %p190, %p191
      %p193 = scmp.le.s32.totalorder 1, %s15
      %p194 = scmp.lt.s32.totalorder %s15, 3
      %p195 = pnand %p193, %p194
      %p196 = pneg %p195
      // Predicated region
      $region9: #{tpu_custom_call.1} parent=5 // pred_check
        _
      $region10: #{tpu_custom_call.1} parent=5 // pred_check_branch
        %198 = sbr.rel (%p195) target = $region12
      $region11: #{tpu_custom_call.1} parent=5 // pred_region
        %s199 = ssub.s32 %s15, 1
        // Predicated region
        $region13: #{tpu_custom_call.1} parent=11 // pred_check
          %p200 = pneg %p105
        $region14: #{tpu_custom_call.1} parent=11 // pred_check_branch
          %202 = sbr.rel (%p200) target = $region16
        $region15: #{tpu_custom_call.1} parent=11 // pred_region
          %s204 = ssub.s32 2048, 2048
          %205 = vsyncadd [#allocation3], %s204
          %s206 = smul.addr %s25, 128
          %s207 = scalar_lea.hbm %s2, %s206
          %s208 = sshll.u32 [#allocation2], 4
          %s209 = int_to_ptr.vmem [resolvable:$true] %s208
          %214 = dma.hbm_to_vmem [thread:$0]  %s207, 2048, %s209, [#allocation3], 128, 128, 8
        $region16: #{tpu_custom_call.1} parent=11 // pred_fallthru
          _
        // Predicated region
        $region17: #{tpu_custom_call.1} parent=11 // pred_check
          %p215 = pneg %p131
        $region18: #{tpu_custom_call.1} parent=11 // pred_check_branch
          %217 = sbr.rel (%p215) target = $region20
        $region19: #{tpu_custom_call.1} parent=11 // pred_region
          %p218 = scmp.lt.s32.totalorder %s25, 0
          %s219 = scalar_select %p218, %s25, 0
          %s220 = smul.addr %s219, 8
          %s221 = scalar_lea.vmem %s3, %s220
        $region20: #{tpu_custom_call.1} parent=11 // pred_fallthru
          _
        // Predicated region
        $region21: #{tpu_custom_call.1} parent=11 // pred_check
          %p222 = pneg %p157
        $region22: #{tpu_custom_call.1} parent=11 // pred_check_branch
          %224 = sbr.rel (%p222) target = $region24
        $region23: #{tpu_custom_call.1} parent=11 // pred_region
          %p225 = scmp.lt.s32.totalorder %s25, 0
          %s226 = scalar_select %p225, %s25, 0
          %s227 = scalar_lea.vmem %s4, %s226
        $region24: #{tpu_custom_call.1} parent=11 // pred_fallthru
          _
      $region12: #{tpu_custom_call.1} parent=5 // pred_fallthru
        _
      %p228 = scmp.lt.s32.totalorder %s15, 2
      // Predicated region
      $region25: #{tpu_custom_call.1} parent=5 // pred_check
        %p229 = pneg %p228
      $region26: #{tpu_custom_call.1} parent=5 // pred_check_branch
        %231 = sbr.rel (%p229) target = $region28
      $region27: #{tpu_custom_call.1} parent=5 // pred_region
        // Predicated region
        $region29: #{tpu_custom_call.1} parent=27 // pred_check
          %p232 = pneg %p47
        $region30: #{tpu_custom_call.1} parent=27 // pred_check_branch
          %234 = sbr.rel (%p232) target = $region32
        $region31: #{tpu_custom_call.1} parent=27 // pred_region
          %s235 = smul.u32 4, %s22
          %p236 = scmp.lt.s32.totalorder %s235, 7
          %s237 = scalar_select %p236, %s235, 7
          %s238 = smul.addr %s237, 8
          %s239 = scalar_lea.vmem %s0, %s238
          %s240 = smul.u32 4, %s22
        $region32: #{tpu_custom_call.1} parent=27 // pred_fallthru
          _
        // Predicated region
        $region33: #{tpu_custom_call.1} parent=27 // pred_check
          %p241 = pneg %p73
        $region34: #{tpu_custom_call.1} parent=27 // pred_check_branch
          %243 = sbr.rel (%p241) target = $region36
        $region35: #{tpu_custom_call.1} parent=27 // pred_region
          %s244 = smul.u32 4, %s22
          %p245 = scmp.lt.s32.totalorder %s244, 7
          %s246 = scalar_select %p245, %s244, 7
          %s247 = smul.addr %s246, 8
          %s248 = scalar_lea.vmem %s1, %s247
          %s249 = smul.u32 4, %s22
        $region36: #{tpu_custom_call.1} parent=27 // pred_fallthru
          _
      $region28: #{tpu_custom_call.1} parent=5 // pred_fallthru
        _
      %p250 = scmp.le.s32.totalorder 1, %s15
      %p251 = scmp.lt.s32.totalorder %s15, 3
      %p252 = pnand %p250, %p251
      %p253 = pneg %p252
      // Predicated region
      $region37: #{tpu_custom_call.1} parent=5 // pred_check
        _
      $region38: #{tpu_custom_call.1} parent=5 // pred_check_branch
        %255 = sbr.rel (%p252) target = $region40
      $region39: #{tpu_custom_call.1} parent=5 // pred_region
        %s256 = ssub.s32 %s15, 1
        // Predicated region
        $region41: #{tpu_custom_call.1} parent=39 // pred_check
          %p257 = pneg %p105
        $region42: #{tpu_custom_call.1} parent=39 // pred_check_branch
          %259 = sbr.rel (%p257) target = $region44
        $region43: #{tpu_custom_call.1} parent=39 // pred_region
          %260 = dma.done [#allocation3], 2048
        $region44: #{tpu_custom_call.1} parent=39 // pred_fallthru
          _
        %s261 = smul.u32 4, %s24
        %p262 = scmp.lt.s32.totalorder %s261, 7
        %s263 = scalar_select %p262, %s261, 7
        %s264 = smul.addr %s263, 8
        %s265 = scalar_lea.vmem %s0, %s264
        %p266 = pneg %p53
        %p267 = pneg %p50
        %s268 = smul.u32 4, %s24
        %p269 = scmp.lt.s32.totalorder %s268, 7
        %s270 = scalar_select %p269, %s268, 7
        %s271 = smul.addr %s270, 8
        %s272 = scalar_lea.vmem %s1, %s271
        %p273 = pneg %p79
        %p274 = pneg %p76
        %p275 = pneg %p105
        %p276 = pneg %p102
        %p277 = scmp.lt.s32.totalorder %s25, 0
        %s278 = scalar_select %p277, %s25, 0
        %s279 = smul.addr %s278, 8
        %s280 = scalar_lea.vmem %s3, %s279
        %p281 = pneg %p131
        %p282 = pneg %p128
        %p283 = scmp.lt.s32.totalorder %s25, 0
        %s284 = scalar_select %p283, %s25, 0
        %s285 = scalar_lea.vmem %s4, %s284
        %p286 = pneg %p157
        %p287 = pneg %p154
        %p288 = pneg %p185
        %p289 = pneg %p182
        %s290 = sand.u32 %s172, 1
        %s291 = scalar_lea.sflag [#allocation4], %s290
        %s292 = sand.u32 %s172, 1
        %s293 = smul.addr %s292, 32
        %s294 = scalar_lea.vmem [#allocation5], %s293
        %s295 = smul.u32 4, %s24
        %p296 = scmp.lt.s32.totalorder %s295, 7
        %s297 = scalar_select %p296, %s295, 7
        %s298 = smul.addr %s297, 8
        %s299 = scalar_lea.vmem %s0, %s298
        %s300 = smul.u32 4, %s24
        %s301 = smul.u32 4, %s24
        %p302 = scmp.lt.s32.totalorder %s301, 7
        %s303 = scalar_select %p302, %s301, 7
        %s304 = smul.addr %s303, 8
        %s305 = scalar_lea.vmem %s1, %s304
        %s306 = smul.u32 4, %s24
        %p307 = scmp.lt.s32.totalorder %s25, 0
        %s308 = scalar_select %p307, %s25, 0
        %s309 = smul.addr %s308, 8
        %s310 = scalar_lea.vmem %s3, %s309
        %p311 = scmp.lt.s32.totalorder %s25, 0
        %s312 = scalar_select %p311, %s25, 0
        %s313 = scalar_lea.vmem %s4, %s312
        %s314 = smul.u32 4, %s24
        %v315 = vld [vmem:[%s313] sm:$0x1]
        %v316 = vld [vmem:[%s299] sm:$0xff]
        %v317 = vld [vmem:[%s299 + $0x8] sm:$0xff]
        %v318 = vld [vmem:[%s299 + $0x10] sm:$0xff]
        %v319 = vld [vmem:[%s299 + $0x18] sm:$0xff]
        %v320 = vld [vmem:[#allocation2] sm:$0xff]
        %v321 = vld [vmem:[#allocation2 + $0x8] sm:$0xff]
        %v322 = vld [vmem:[#allocation2 + $0x10] sm:$0xff]
        %v323 = vld [vmem:[#allocation2 + $0x18] sm:$0xff]
        %v324 = vld [vmem:[#allocation2 + $0x20] sm:$0xff]
        %v325 = vld [vmem:[#allocation2 + $0x28] sm:$0xff]
        %v326 = vld [vmem:[#allocation2 + $0x30] sm:$0xff]
        %v327 = vld [vmem:[#allocation2 + $0x38] sm:$0xff]
        %v328 = vld [vmem:[#allocation2 + $0x40] sm:$0xff]
        %v329 = vld [vmem:[#allocation2 + $0x48] sm:$0xff]
        %v330 = vld [vmem:[#allocation2 + $0x50] sm:$0xff]
        %v331 = vld [vmem:[#allocation2 + $0x58] sm:$0xff]
        %v332 = vld [vmem:[#allocation2 + $0x60] sm:$0xff]
        %v333 = vld [vmem:[#allocation2 + $0x68] sm:$0xff]
        %v334 = vld [vmem:[#allocation2 + $0x70] sm:$0xff]
        %v335 = vld [vmem:[#allocation2 + $0x78] sm:$0xff]
        %336 = vmatprep.subr.mxu0 0.0
        %337 = vmatpush1.msra.mxu0 %v320
        %338 = vmatprep.subr.mxu0 0.0
        %339 = vmatpush1.msra.mxu0 %v321
        %340 = vmatprep.subr.mxu0 0.0
        %341 = vmatpush1.msra.mxu0 %v322
        %342 = vmatprep.subr.mxu0 0.0
        %343 = vmatpush1.msra.mxu0 %v323
        %344 = vmatprep.subr.mxu0 0.0
        %345 = vmatpush1.msra.mxu0 %v324
        %346 = vmatprep.subr.mxu0 0.0
        %347 = vmatpush1.msra.mxu0 %v325
        %348 = vmatprep.subr.mxu0 0.0
        %349 = vmatpush1.msra.mxu0 %v326
        %350 = vmatprep.subr.mxu0 0.0
        %351 = vmatpush1.msra.mxu0 %v327
        %352 = vmatprep.subr.mxu0 0.0
        %353 = vmatpush1.msra.mxu0 %v328
        %354 = vmatprep.subr.mxu0 0.0
        %355 = vmatpush1.msra.mxu0 %v329
        %356 = vmatprep.subr.mxu0 0.0
        %357 = vmatpush1.msra.mxu0 %v330
        %358 = vmatprep.subr.mxu0 0.0
        %359 = vmatpush1.msra.mxu0 %v331
        %360 = vmatprep.subr.mxu0 0.0
        %361 = vmatpush1.msra.mxu0 %v332
        %362 = vmatprep.subr.mxu0 0.0
        %363 = vmatpush1.msra.mxu0 %v333
        %364 = vmatprep.subr.mxu0 0.0
        %365 = vmatpush1.msra.mxu0 %v334
        %366 = vmatprep.subr.mxu0 0.0
        %367 = vmatpush1.msra.mxu0 %v335
        %368 = vmatprep.subr.mxu0 0.0
        %369 = vmatpush1.msra.mxu0 0.0
        %370 = vmatprep.subr.mxu0 0.0
        %371 = vmatpush1.msra.mxu0 0.0
        %372 = vmatprep.subr.mxu0 0.0
        %373 = vmatpush1.msra.mxu0 0.0
        %374 = vmatprep.subr.mxu0 0.0
        %375 = vmatpush1.msra.mxu0 0.0
        %376 = vmatprep.subr.mxu0 0.0
        %377 = vmatpush1.msra.mxu0 0.0
        %378 = vmatprep.subr.mxu0 0.0
        %379 = vmatpush1.msra.mxu0 0.0
        %380 = vmatprep.subr.mxu0 0.0
        %381 = vmatpush1.msra.mxu0 0.0
        %382 = vmatprep.subr.mxu0 0.0
        %383 = vmatpush1.msra.mxu0 0.0
        %384 = vmatprep.subr.mxu0 0.0
        %385 = vmatpush1.msra.mxu0 0.0
        %386 = vmatprep.subr.mxu0 0.0
        %387 = vmatpush1.msra.mxu0 0.0
        %388 = vmatprep.subr.mxu0 0.0
        %389 = vmatpush1.msra.mxu0 0.0
        %390 = vmatprep.subr.mxu0 0.0
        %391 = vmatpush1.msra.mxu0 0.0
        %392 = vmatprep.subr.mxu0 0.0
        %393 = vmatpush1.msra.mxu0 0.0
        %394 = vmatprep.subr.mxu0 0.0
        %395 = vmatpush1.msra.mxu0 0.0
        %396 = vmatprep.subr.mxu0 0.0
        %397 = vmatpush1.msra.mxu0 0.0
        %398 = vmatprep.subr.mxu0 0.0
        %399 = vmatpush1.msra.mxu0 0.0
        %400 = vmatprep.mubr.f32.mxu0 0.0
        %401 = vmatmul.mubr.f32.gmra.mrb[0].mxu0 %v316
        %v402 = vpop.f32.mrb[0].mxu0
        %v403 = vadd.f32 0.0, %v402
        %v404 = vpop.f32.mrb[0].mxu0
        %405 = vmatprep.mubr.f32.mxu0 0.0
        %406 = vmatmul.mubr.f32.gmra.mrb[0].mxu0 %v317
        %v407 = vpop.f32.mrb[0].mxu0
        %v408 = vadd.f32 0.0, %v407
        %v409 = vpop.f32.mrb[0].mxu0
        %410 = vmatprep.mubr.f32.mxu0 0.0
        %411 = vmatmul.mubr.f32.gmra.mrb[0].mxu0 %v318
        %v412 = vpop.f32.mrb[0].mxu0
        %v413 = vadd.f32 0.0, %v412
        %v414 = vpop.f32.mrb[0].mxu0
        %415 = vmatprep.mubr.f32.mxu0 0.0
        %416 = vmatmul.mubr.f32.gmra.mrb[0].mxu0 %v319
        %v417 = vpop.f32.mrb[0].mxu0
        %v418 = vadd.f32 0.0, %v417
        %v419 = vpop.f32.mrb[0].mxu0
        %420 = vdwg.mxu0
        %v422 = vlaneseq
        %v423 = vshrl.u32 %v422, 7
        %v424 = vsub.s32 0, %v423
        %v425 = vrot.slane %v315, %v424
        %v427 = vadd.f32 %v425, %v403
        %v428 = vadd.f32 %v425, %v408
        %v429 = vadd.f32 %v425, %v413
        %v430 = vadd.f32 %v425, %v418
        %431 = vst [vmem:[%s294] sm:$0xff] %v427
        %432 = vst [vmem:[%s294 + $0x8] sm:$0xff] %v428
        %433 = vst [vmem:[%s294 + $0x10] sm:$0xff] %v429
        %434 = vst [vmem:[%s294 + $0x18] sm:$0xff] %v430
        %v435 = vld [vmem:[%s294] sm:$0xff]
        %v436 = vld [vmem:[%s294 + $0x8] sm:$0xff]
        %v437 = vld [vmem:[%s294 + $0x10] sm:$0xff]
        %v438 = vld [vmem:[%s294 + $0x18] sm:$0xff]
        %v439 = vld [vmem:[%s305] sm:$0xff]
        %v440 = vld [vmem:[%s305 + $0x8] sm:$0xff]
        %v441 = vld [vmem:[%s305 + $0x10] sm:$0xff]
        %v442 = vld [vmem:[%s305 + $0x18] sm:$0xff]
        %v443 = vld [vmem:[%s310] sm:$0xff]
        %v444 = vld [vmem:[%s310 + $0x8] sm:$0xff]
        %v445 = vld [vmem:[%s310 + $0x10] sm:$0xff]
        %v446 = vld [vmem:[%s310 + $0x18] sm:$0xff]
        %v447 = vld [vmem:[%s310 + $0x20] sm:$0xff]
        %v448 = vld [vmem:[%s310 + $0x28] sm:$0xff]
        %vm449 = vcmask 392192
        %v451 = vsel %vm449, %v439, 0
        %v454 = vsel %vm449, %v440, 0
        %v457 = vsel %vm449, %v441, 0
        %v460 = vsel %vm449, %v442, 0
        %462 = vmatprep.subr.mxu0 0.0
        %463 = vmatpush1.msra.mxu0 %v443
        %464 = vmatprep.subr.mxu0 0.0
        %465 = vmatpush1.msra.mxu0 %v444
        %466 = vmatprep.subr.mxu0 0.0
        %467 = vmatpush1.msra.mxu0 %v445
        %468 = vmatprep.subr.mxu0 0.0
        %469 = vmatpush1.msra.mxu0 %v446
        %470 = vmatprep.subr.mxu0 0.0
        %471 = vmatpush1.msra.mxu0 %v447
        %472 = vmatprep.subr.mxu0 0.0
        %473 = vmatpush1.msra.mxu0 %v448
        %474 = vmatprep.subr.mxu0 0.0
        %475 = vmatpush1.msra.mxu0 0.0
        %476 = vmatprep.subr.mxu0 0.0
        %477 = vmatpush1.msra.mxu0 0.0
        %478 = vmatprep.subr.mxu0 0.0
        %479 = vmatpush1.msra.mxu0 0.0
        %480 = vmatprep.subr.mxu0 0.0
        %481 = vmatpush1.msra.mxu0 0.0
        %482 = vmatprep.subr.mxu0 0.0
        %483 = vmatpush1.msra.mxu0 0.0
        %484 = vmatprep.subr.mxu0 0.0
        %485 = vmatpush1.msra.mxu0 0.0
        %486 = vmatprep.subr.mxu0 0.0
        %487 = vmatpush1.msra.mxu0 0.0
        %488 = vmatprep.subr.mxu0 0.0
        %489 = vmatpush1.msra.mxu0 0.0
        %490 = vmatprep.subr.mxu0 0.0
        %491 = vmatpush1.msra.mxu0 0.0
        %492 = vmatprep.subr.mxu0 0.0
        %493 = vmatpush1.msra.mxu0 0.0
        %494 = vmatprep.subr.mxu0 0.0
        %495 = vmatpush1.msra.mxu0 0.0
        %496 = vmatprep.subr.mxu0 0.0
        %497 = vmatpush1.msra.mxu0 0.0
        %498 = vmatprep.subr.mxu0 0.0
        %499 = vmatpush1.msra.mxu0 0.0
        %500 = vmatprep.subr.mxu0 0.0
        %501 = vmatpush1.msra.mxu0 0.0
        %502 = vmatprep.subr.mxu0 0.0
        %503 = vmatpush1.msra.mxu0 0.0
        %504 = vmatprep.subr.mxu0 0.0
        %505 = vmatpush1.msra.mxu0 0.0
        %506 = vmatprep.subr.mxu0 0.0
        %507 = vmatpush1.msra.mxu0 0.0
        %508 = vmatprep.subr.mxu0 0.0
        %509 = vmatpush1.msra.mxu0 0.0
        %510 = vmatprep.subr.mxu0 0.0
        %511 = vmatpush1.msra.mxu0 0.0
        %512 = vmatprep.subr.mxu0 0.0
        %513 = vmatpush1.msra.mxu0 0.0
        %514 = vmatprep.subr.mxu0 0.0
        %515 = vmatpush1.msra.mxu0 0.0
        %516 = vmatprep.subr.mxu0 0.0
        %517 = vmatpush1.msra.mxu0 0.0
        %518 = vmatprep.subr.mxu0 0.0
        %519 = vmatpush1.msra.mxu0 0.0
        %520 = vmatprep.subr.mxu0 0.0
        %521 = vmatpush1.msra.mxu0 0.0
        %522 = vmatprep.subr.mxu0 0.0
        %523 = vmatpush1.msra.mxu0 0.0
        %524 = vmatprep.subr.mxu0 0.0
        %525 = vmatpush1.msra.mxu0 0.0
        %526 = vmatprep.mubr.f32.mxu0 0.0
        %527 = vmatmul.mubr.f32.gmra.mrb[0].mxu0 %v451
        %v528 = vpop.f32.mrb[0].mxu0
        %v529 = vadd.f32 0.0, %v528
        %v530 = vpop.f32.mrb[0].mxu0
        %531 = vmatprep.mubr.f32.mxu0 0.0
        %532 = vmatmul.mubr.f32.gmra.mrb[0].mxu0 %v454
        %v533 = vpop.f32.mrb[0].mxu0
        %v534 = vadd.f32 0.0, %v533
        %v535 = vpop.f32.mrb[0].mxu0
        %536 = vmatprep.mubr.f32.mxu0 0.0
        %537 = vmatmul.mubr.f32.gmra.mrb[0].mxu0 %v457
        %v538 = vpop.f32.mrb[0].mxu0
        %v539 = vadd.f32 0.0, %v538
        %v540 = vpop.f32.mrb[0].mxu0
        %541 = vmatprep.mubr.f32.mxu0 0.0
        %542 = vmatmul.mubr.f32.gmra.mrb[0].mxu0 %v460
        %v543 = vpop.f32.mrb[0].mxu0
        %v544 = vadd.f32 0.0, %v543
        %v545 = vpop.f32.mrb[0].mxu0
        %546 = vdwg.mxu0
        %v547 = vadd.f32 %v435, %v529
        %v548 = vadd.f32 %v436, %v534
        %v549 = vadd.f32 %v437, %v539
        %v550 = vadd.f32 %v438, %v544
        %551 = vst [vmem:[%s294] sm:$0xff] %v547
        %552 = vst [vmem:[%s294 + $0x8] sm:$0xff] %v548
        %553 = vst [vmem:[%s294 + $0x10] sm:$0xff] %v549
        %554 = vst [vmem:[%s294 + $0x18] sm:$0xff] %v550
        %s555 = sand.u32 %s172, 1
        %s556 = scalar_lea.sflag [#allocation4], %s555
        %s557 = sand.u32 %s172, 1
        %s558 = smul.addr %s557, 32
        %s559 = scalar_lea.vmem [#allocation5], %s558
        // Predicated region
        $region45: #{tpu_custom_call.1} parent=39 // pred_check
          %p560 = pneg %p182
        $region46: #{tpu_custom_call.1} parent=39 // pred_check_branch
          %562 = sbr.rel (%p560) target = $region48
        $region47: #{tpu_custom_call.1} parent=39 // pred_region
          %s563 = smul.u32 4, %s24
          %s565 = ssub.s32 512, 512
          %566 = vsyncadd %s556, %s565
          %s567 = sadd.s32 %s25, %s563
          %s568 = smul.addr %s567, 128
          %s569 = scalar_lea.hbm %s5, %s568
          %s570 = sshll.u32 %s559, 4
          %s571 = int_to_ptr.vmem [resolvable:$true] %s570
          %576 = dma.vmem_to_hbm [thread:$0]  %s571, 512, %s569, %s556, 128, 128, 8
        $region48: #{tpu_custom_call.1} parent=39 // pred_fallthru
          _
      $region40: #{tpu_custom_call.1} parent=5 // pred_fallthru
        _
      %p577 = scmp.le.s32.totalorder 2, %s15
      // Predicated region
      $region49: #{tpu_custom_call.1} parent=5 // pred_check
        %p578 = pneg %p577
      $region50: #{tpu_custom_call.1} parent=5 // pred_check_branch
        %580 = sbr.rel (%p578) target = $region52
      $region51: #{tpu_custom_call.1} parent=5 // pred_region
        %s581 = ssub.s32 %s15, 2
        // Predicated region
        $region53: #{tpu_custom_call.1} parent=51 // pred_check
          %p582 = pneg %p188
        $region54: #{tpu_custom_call.1} parent=51 // pred_check_branch
          %584 = sbr.rel (%p582) target = $region56
        $region55: #{tpu_custom_call.1} parent=51 // pred_region
          %s585 = sand.u32 %s173, 1
          %s586 = scalar_lea.sflag [#allocation4], %s585
          %s587 = sand.u32 %s173, 1
          %s588 = smul.addr %s587, 32
          %s589 = scalar_lea.vmem [#allocation5], %s588
          %590 = dma.done %s586, 512
        $region56: #{tpu_custom_call.1} parent=51 // pred_fallthru
          _
      $region52: #{tpu_custom_call.1} parent=5 // pred_fallthru
        _
    $region6: #{tpu_custom_call.1} parent=1 // loop_footer
      %s19 = sadd.s32 1, %s15
    $region7: #{tpu_custom_call.1} parent=1 // loop_footer_branch
      %14 = sbr.rel target = $region3
    $region8: #{tpu_custom_call.1} parent=1 // loop_exit
      _
    %591 = vsyncpa [#allocation3], 1
    %s592 = scalar_lea.sflag [#allocation3], 1
    %593 = vsyncpa %s592, 1
    %594 = vsyncpa [#allocation4], 1
    %s595 = scalar_lea.sflag [#allocation4], 1
    %596 = vsyncpa %s595, 1

// kernel: tpu_custom_call.1
$region0: #{tpu_custom_call.1}
  #allocation0 [shape = 'u32[]', space=smem, size = 0x4, offset = 0x4, fixed_abs, tag = 'smem constant byte address 0x4 - core index']
  #allocation1 [shape = 'u32[144,128]{1,0:T(1,128)}', space=vmem, size = 0x12000, scoped, tag = 'internal scratch']
  %s0 = inlined_call_operand.vmem [shape: f32[64,128], index: 0, kind: input, shape index: {}]
  %s1 = inlined_call_operand.vmem [shape: f32[64,48], index: 1, kind: input, shape index: {}]
  %s2 = inlined_call_operand.hbm [shape: f32[128,128], index: 2, kind: input, shape index: {}]
  %s3 = inlined_call_operand.vmem [shape: f32[48,128], index: 3, kind: input, shape index: {}]
  %s4 = inlined_call_operand.vmem [shape: f32[1,128], index: 4, kind: input, shape index: {}]
  %s5 = inlined_call_operand.hbm [shape: f32[64,128], index: 5, kind: output, shape index: {}]
  %s6 = sld [smem:[#allocation0]]
  $region57: #{tpu_custom_call.1} parent=0
    _
  %s8 = ssub.s32 1, %s6
  %s9 = scalar_select 0, %s8, %s6
  $region1: #{tpu_custom_call.1} parent=0
    #allocation2 [shape = 'u8[65536]{0}', space=vmem, size = 0x10000, scoped, tag = 'input window, operand 2, single buffered']
    #allocation3 [shape = 's32[2]{0}', space=sflag, size = 0x8, scoped, tag = 'scoped memory for tpu_custom_call.1']
    #allocation4 [shape = 's32[2]{0}', space=sflag, size = 0x8, scoped, tag = 'scoped memory for tpu_custom_call.1']
    #allocation5 [shape = 'u8[32768]{0}', space=vmem, size = 0x8000, scoped, tag = 'output window, operand 0']
    %10 = vsyncpa [#allocation3], 0
    %11 = vsyncpa [#allocation4], 0
    %s12 = scalar_lea.sflag [#allocation4], 1
    %13 = vsyncpa %s12, 0
    loop: start=0, step=1, limit=4
    $region2: #{tpu_custom_call.1} parent=1 // loop_pre_header
      _
    $region3: #{tpu_custom_call.1} parent=1 // loop_header
      %s15 = sphi 0, %s19
      %p16 = scmp.ge.s32.totalorder %s15, 4
      %s22 = sphi 0, %s34
      %s23 = sphi 0, %s30
      %s24 = sphi 0, %s22
      %s25 = sphi 0, %s23
      %s26 = sphi 0, %s24
      %s27 = sphi 0, %s25
      %s37 = sphi 0, %s39
      %s40 = sphi 0, %s37
      %s41 = sphi 0, %s40
      %s57 = sphi 0, %s41
      %s63 = sphi 0, %s65
      %s66 = sphi 0, %s63
      %s67 = sphi 0, %s66
      %s83 = sphi 0, %s67
      %s89 = sphi 0, %s91
      %s92 = sphi 0, %s89
      %s93 = sphi 0, %s92
      %s109 = sphi 0, %s93
      %s115 = sphi 0, %s117
      %s118 = sphi 0, %s115
      %s119 = sphi 0, %s118
      %s135 = sphi 0, %s119
      %s141 = sphi 0, %s143
      %s144 = sphi 0, %s141
      %s145 = sphi 0, %s144
      %s161 = sphi 0, %s145
      %s169 = sphi 0, %s171
      %s172 = sphi 0, %s169
      %s173 = sphi 0, %s172
      %s189 = sphi 0, %s173
    $region4: #{tpu_custom_call.1} parent=1 // loop_header_branch
      %18 = sbr.rel (%p16) target = $region8
    $region5: #{tpu_custom_call.1} parent=1 // loop_body
      %s20 = ssub.s32 %s15, 1
      %s21 = ssub.s32 %s15, 2
      %s28 = sadd.s32 1, %s23
      %p29 = scmp.ge.s32.totalorder %s28, 1
      %s30 = scalar_select %p29, 0, %s28
      %s31 = sadd.s32 1, %s22
      %s32 = scalar_select %p29, %s31, %s22
      %p33 = scmp.ge.s32.totalorder %s32, 2
      %s34 = scalar_select %p33, 0, %s32
      %s35 = ssub.s32 %s22, %s34
      %p36 = scmp.eq.s32.totalorder %s35, 0
      %s38 = sadd.s32 %s37, 1
      %s39 = scalar_select %p36, %s37, %s38
      %p42 = pneg %p36
      %p43 = scmp.eq.s32.totalorder %s15, 1
      %p44 = por %p42, %p43
      %p45 = scmp.ne.s32.totalorder %s37, %s40
      %p46 = scmp.eq.s32.totalorder %s15, 0
      %p47 = por %p45, %p46
      %p48 = scmp.ne.s32.totalorder %s37, %s40
      %p49 = scmp.eq.s32.totalorder %s20, 1
      %p50 = por %p48, %p49
      %p51 = scmp.ne.s32.totalorder %s40, %s41
      %p52 = scmp.eq.s32.totalorder %s20, 0
      %p53 = por %p51, %p52
      %p54 = scmp.ne.s32.totalorder %s40, %s41
      %p55 = scmp.eq.s32.totalorder %s21, 1
      %p56 = por %p54, %p55
      %p58 = scmp.ne.s32.totalorder %s41, %s57
      %p59 = scmp.eq.s32.totalorder %s21, 0
      %p60 = por %p58, %p59
      %s61 = ssub.s32 %s22, %s34
      %p62 = scmp.eq.s32.totalorder %s61, 0
      %s64 = sadd.s32 %s63, 1
      %s65 = scalar_select %p62, %s63, %s64
      %p68 = pneg %p62
      %p69 = scmp.eq.s32.totalorder %s15, 1
      %p70 = por %p68, %p69
      %p71 = scmp.ne.s32.totalorder %s63, %s66
      %p72 = scmp.eq.s32.totalorder %s15, 0
      %p73 = por %p71, %p72
      %p74 = scmp.ne.s32.totalorder %s63, %s66
      %p75 = scmp.eq.s32.totalorder %s20, 1
      %p76 = por %p74, %p75
      %p77 = scmp.ne.s32.totalorder %s66, %s67
      %p78 = scmp.eq.s32.totalorder %s20, 0
      %p79 = por %p77, %p78
      %p80 = scmp.ne.s32.totalorder %s66, %s67
      %p81 = scmp.eq.s32.totalorder %s21, 1
      %p82 = por %p80, %p81
      %p84 = scmp.ne.s32.totalorder %s67, %s83
      %p85 = scmp.eq.s32.totalorder %s21, 0
      %p86 = por %p84, %p85
      %s87 = ssub.s32 %s23, %s30
      %p88 = scmp.eq.s32.totalorder %s87, 0
      %s90 = sadd.s32 %s89, 1
      %s91 = scalar_select %p88, %s89, %s90
      %p94 = pneg %p88
      %p95 = scmp.eq.s32.totalorder %s15, 1
      %p96 = por %p94, %p95
      %p97 = scmp.ne.s32.totalorder %s89, %s92
      %p98 = scmp.eq.s32.totalorder %s15, 0
      %p99 = por %p97, %p98
      %p100 = scmp.ne.s32.totalorder %s89, %s92
      %p101 = scmp.eq.s32.totalorder %s20, 1
      %p102 = por %p100, %p101
      %p103 = scmp.ne.s32.totalorder %s92, %s93
      %p104 = scmp.eq.s32.totalorder %s20, 0
      %p105 = por %p103, %p104
      %p106 = scmp.ne.s32.totalorder %s92, %s93
      %p107 = scmp.eq.s32.totalorder %s21, 1
      %p108 = por %p106, %p107
      %p110 = scmp.ne.s32.totalorder %s93, %s109
      %p111 = scmp.eq.s32.totalorder %s21, 0
      %p112 = por %p110, %p111
      %s113 = ssub.s32 %s23, %s30
      %p114 = scmp.eq.s32.totalorder %s113, 0
      %s116 = sadd.s32 %s115, 1
      %s117 = scalar_select %p114, %s115, %s116
      %p120 = pneg %p114
      %p121 = scmp.eq.s32.totalorder %s15, 1
      %p122 = por %p120, %p121
      %p123 = scmp.ne.s32.totalorder %s115, %s118
      %p124 = scmp.eq.s32.totalorder %s15, 0
      %p125 = por %p123, %p124
      %p126 = scmp.ne.s32.totalorder %s115, %s118
      %p127 = scmp.eq.s32.totalorder %s20, 1
      %p128 = por %p126, %p127
      %p129 = scmp.ne.s32.totalorder %s118, %s119
      %p130 = scmp.eq.s32.totalorder %s20, 0
      %p131 = por %p129, %p130
      %p132 = scmp.ne.s32.totalorder %s118, %s119
      %p133 = scmp.eq.s32.totalorder %s21, 1
      %p134 = por %p132, %p133
      %p136 = scmp.ne.s32.totalorder %s119, %s135
      %p137 = scmp.eq.s32.totalorder %s21, 0
      %p138 = por %p136, %p137
      %s139 = ssub.s32 %s23, %s30
      %p140 = scmp.eq.s32.totalorder %s139, 0
      %s142 = sadd.s32 %s141, 1
      %s143 = scalar_select %p140, %s141, %s142
      %p146 = pneg %p140
      %p147 = scmp.eq.s32.totalorder %s15, 1
      %p148 = por %p146, %p147
      %p149 = scmp.ne.s32.totalorder %s141, %s144
      %p150 = scmp.eq.s32.totalorder %s15, 0
      %p151 = por %p149, %p150
      %p152 = scmp.ne.s32.totalorder %s141, %s144
      %p153 = scmp.eq.s32.totalorder %s20, 1
      %p154 = por %p152, %p153
      %p155 = scmp.ne.s32.totalorder %s144, %s145
      %p156 = scmp.eq.s32.totalorder %s20, 0
      %p157 = por %p155, %p156
      %p158 = scmp.ne.s32.totalorder %s144, %s145
      %p159 = scmp.eq.s32.totalorder %s21, 1
      %p160 = por %p158, %p159
      %p162 = scmp.ne.s32.totalorder %s145, %s161
      %p163 = scmp.eq.s32.totalorder %s21, 0
      %p164 = por %p162, %p163
      %s165 = ssub.s32 %s22, %s34
      %s166 = ssub.s32 %s23, %s30
      %s167 = sor.u32 %s165, %s166
      %p168 = scmp.eq.s32.totalorder %s167, 0
      %s170 = sadd.s32 %s169, 1
      %s171 = scalar_select %p168, %s169, %s170
      %p174 = pneg %p168
      %p175 = scmp.eq.s32.totalorder %s15, 1
      %p176 = por %p174, %p175
      %p177 = scmp.ne.s32.totalorder %s169, %s172
      %p178 = scmp.eq.s32.totalorder %s15, 0
      %p179 = por %p177, %p178
      %p180 = scmp.ne.s32.totalorder %s169, %s172
      %p181 = scmp.eq.s32.totalorder %s20, 1
      %p182 = por %p180, %p181
      %p183 = scmp.ne.s32.totalorder %s172, %s173
      %p184 = scmp.eq.s32.totalorder %s20, 0
      %p185 = por %p183, %p184
      %p186 = scmp.ne.s32.totalorder %s172, %s173
      %p187 = scmp.eq.s32.totalorder %s21, 1
      %p188 = por %p186, %p187
      %p190 = scmp.ne.s32.totalorder %s173, %s189
      %p191 = scmp.eq.s32.totalorder %s21, 0
      %p192 = por %p190, %p191
      %p193 = scmp.le.s32.totalorder 1, %s15
      %p194 = scmp.lt.s32.totalorder %s15, 3
      %p195 = pnand %p193, %p194
      %p196 = pneg %p195
      // Predicated region
      $region9: #{tpu_custom_call.1} parent=5 // pred_check
        _
      $region10: #{tpu_custom_call.1} parent=5 // pred_check_branch
        %198 = sbr.rel (%p195) target = $region12
      $region11: #{tpu_custom_call.1} parent=5 // pred_region
        %s199 = ssub.s32 %s15, 1
        // Predicated region
        $region13: #{tpu_custom_call.1} parent=11 // pred_check
          %p200 = pneg %p105
        $region14: #{tpu_custom_call.1} parent=11 // pred_check_branch
          %202 = sbr.rel (%p200) target = $region16
        $region15: #{tpu_custom_call.1} parent=11 // pred_region
          %s204 = ssub.s32 2048, 2048
          %205 = vsyncadd [#allocation3], %s204
          %s206 = smul.addr %s25, 128
          %s207 = scalar_lea.hbm %s2, %s206
          %s208 = sshll.u32 [#allocation2], 4
          %s209 = int_to_ptr.vmem [resolvable:$true] %s208
          %214 = dma.hbm_to_vmem [thread:$0]  %s207, 2048, %s209, [#allocation3], 128, 128, 8
        $region16: #{tpu_custom_call.1} parent=11 // pred_fallthru
          _
        // Predicated region
        $region17: #{tpu_custom_call.1} parent=11 // pred_check
          %p215 = pneg %p131
        $region18: #{tpu_custom_call.1} parent=11 // pred_check_branch
          %217 = sbr.rel (%p215) target = $region20
        $region19: #{tpu_custom_call.1} parent=11 // pred_region
          %p218 = scmp.lt.s32.totalorder %s25, 0
          %s219 = scalar_select %p218, %s25, 0
          %s220 = smul.addr %s219, 8
          %s221 = scalar_lea.vmem %s3, %s220
        $region20: #{tpu_custom_call.1} parent=11 // pred_fallthru
          _
        // Predicated region
        $region21: #{tpu_custom_call.1} parent=11 // pred_check
          %p222 = pneg %p157
        $region22: #{tpu_custom_call.1} parent=11 // pred_check_branch
          %224 = sbr.rel (%p222) target = $region24
        $region23: #{tpu_custom_call.1} parent=11 // pred_region
          %p225 = scmp.lt.s32.totalorder %s25, 0
          %s226 = scalar_select %p225, %s25, 0
          %s227 = scalar_lea.vmem %s4, %s226
        $region24: #{tpu_custom_call.1} parent=11 // pred_fallthru
          _
      $region12: #{tpu_custom_call.1} parent=5 // pred_fallthru
        _
      %p228 = scmp.lt.s32.totalorder %s15, 2
      // Predicated region
      $region25: #{tpu_custom_call.1} parent=5 // pred_check
        %p229 = pneg %p228
      $region26: #{tpu_custom_call.1} parent=5 // pred_check_branch
        %231 = sbr.rel (%p229) target = $region28
      $region27: #{tpu_custom_call.1} parent=5 // pred_region
        // Predicated region
        $region29: #{tpu_custom_call.1} parent=27 // pred_check
          %p232 = pneg %p47
        $region30: #{tpu_custom_call.1} parent=27 // pred_check_branch
          %234 = sbr.rel (%p232) target = $region32
        $region31: #{tpu_custom_call.1} parent=27 // pred_region
          %s235 = smul.u32 4, %s22
          %p236 = scmp.lt.s32.totalorder %s235, 7
          %s237 = scalar_select %p236, %s235, 7
          %s238 = smul.addr %s237, 8
          %s239 = scalar_lea.vmem %s0, %s238
          %s240 = smul.u32 4, %s22
        $region32: #{tpu_custom_call.1} parent=27 // pred_fallthru
          _
        // Predicated region
        $region33: #{tpu_custom_call.1} parent=27 // pred_check
          %p241 = pneg %p73
        $region34: #{tpu_custom_call.1} parent=27 // pred_check_branch
          %243 = sbr.rel (%p241) target = $region36
        $region35: #{tpu_custom_call.1} parent=27 // pred_region
          %s244 = smul.u32 4, %s22
          %p245 = scmp.lt.s32.totalorder %s244, 7
          %s246 = scalar_select %p245, %s244, 7
          %s247 = smul.addr %s246, 8
          %s248 = scalar_lea.vmem %s1, %s247
          %s249 = smul.u32 4, %s22
        $region36: #{tpu_custom_call.1} parent=27 // pred_fallthru
          _
      $region28: #{tpu_custom_call.1} parent=5 // pred_fallthru
        _
      %p250 = scmp.le.s32.totalorder 1, %s15
      %p251 = scmp.lt.s32.totalorder %s15, 3
      %p252 = pnand %p250, %p251
      %p253 = pneg %p252
      // Predicated region
      $region37: #{tpu_custom_call.1} parent=5 // pred_check
        _
      $region38: #{tpu_custom_call.1} parent=5 // pred_check_branch
        %255 = sbr.rel (%p252) target = $region40
      $region39: #{tpu_custom_call.1} parent=5 // pred_region
        %s256 = ssub.s32 %s15, 1
        // Predicated region
        $region41: #{tpu_custom_call.1} parent=39 // pred_check
          %p257 = pneg %p105
        $region42: #{tpu_custom_call.1} parent=39 // pred_check_branch
          %259 = sbr.rel (%p257) target = $region44
        $region43: #{tpu_custom_call.1} parent=39 // pred_region
          %260 = dma.done [#allocation3], 2048
        $region44: #{tpu_custom_call.1} parent=39 // pred_fallthru
          _
        %s261 = smul.u32 4, %s24
        %p262 = scmp.lt.s32.totalorder %s261, 7
        %s263 = scalar_select %p262, %s261, 7
        %s264 = smul.addr %s263, 8
        %s265 = scalar_lea.vmem %s0, %s264
        %p266 = pneg %p53
        %p267 = pneg %p50
        %s268 = smul.u32 4, %s24
        %p269 = scmp.lt.s32.totalorder %s268, 7
        %s270 = scalar_select %p269, %s268, 7
        %s271 = smul.addr %s270, 8
        %s272 = scalar_lea.vmem %s1, %s271
        %p273 = pneg %p79
        %p274 = pneg %p76
        %p275 = pneg %p105
        %p276 = pneg %p102
        %p277 = scmp.lt.s32.totalorder %s25, 0
        %s278 = scalar_select %p277, %s25, 0
        %s279 = smul.addr %s278, 8
        %s280 = scalar_lea.vmem %s3, %s279
        %p281 = pneg %p131
        %p282 = pneg %p128
        %p283 = scmp.lt.s32.totalorder %s25, 0
        %s284 = scalar_select %p283, %s25, 0
        %s285 = scalar_lea.vmem %s4, %s284
        %p286 = pneg %p157
        %p287 = pneg %p154
        %p288 = pneg %p185
        %p289 = pneg %p182
        %s290 = sand.u32 %s172, 1
        %s291 = scalar_lea.sflag [#allocation4], %s290
        %s292 = sand.u32 %s172, 1
        %s293 = smul.addr %s292, 32
        %s294 = scalar_lea.vmem [#allocation5], %s293
        %s295 = smul.u32 4, %s24
        %p296 = scmp.lt.s32.totalorder %s295, 7
        %s297 = scalar_select %p296, %s295, 7
        %s298 = smul.addr %s297, 8
        %s299 = scalar_lea.vmem %s0, %s298
        %s300 = smul.u32 4, %s24
        %s301 = smul.u32 4, %s24
        %p302 = scmp.lt.s32.totalorder %s301, 7
        %s303 = scalar_select %p302, %s301, 7
        %s304 = smul.addr %s303, 8
        %s305 = scalar_lea.vmem %s1, %s304
        %s306 = smul.u32 4, %s24
        %p307 = scmp.lt.s32.totalorder %s25, 0
        %s308 = scalar_select %p307, %s25, 0
        %s309 = smul.addr %s308, 8
        %s310 = scalar_lea.vmem %s3, %s309
        %p311 = scmp.lt.s32.totalorder %s25, 0
        %s312 = scalar_select %p311, %s25, 0
        %s313 = scalar_lea.vmem %s4, %s312
        %s314 = smul.u32 4, %s24
        %v315 = vld [vmem:[%s313] sm:$0x1]
        %v316 = vld [vmem:[%s299] sm:$0xff]
        %v317 = vld [vmem:[%s299 + $0x8] sm:$0xff]
        %v318 = vld [vmem:[%s299 + $0x10] sm:$0xff]
        %v319 = vld [vmem:[%s299 + $0x18] sm:$0xff]
        %v320 = vld [vmem:[#allocation2] sm:$0xff]
        %v321 = vld [vmem:[#allocation2 + $0x8] sm:$0xff]
        %v322 = vld [vmem:[#allocation2 + $0x10] sm:$0xff]
        %v323 = vld [vmem:[#allocation2 + $0x18] sm:$0xff]
        %v324 = vld [vmem:[#allocation2 + $0x20] sm:$0xff]
        %v325 = vld [vmem:[#allocation2 + $0x28] sm:$0xff]
        %v326 = vld [vmem:[#allocation2 + $0x30] sm:$0xff]
        %v327 = vld [vmem:[#allocation2 + $0x38] sm:$0xff]
        %v328 = vld [vmem:[#allocation2 + $0x40] sm:$0xff]
        %v329 = vld [vmem:[#allocation2 + $0x48] sm:$0xff]
        %v330 = vld [vmem:[#allocation2 + $0x50] sm:$0xff]
        %v331 = vld [vmem:[#allocation2 + $0x58] sm:$0xff]
        %v332 = vld [vmem:[#allocation2 + $0x60] sm:$0xff]
        %v333 = vld [vmem:[#allocation2 + $0x68] sm:$0xff]
        %v334 = vld [vmem:[#allocation2 + $0x70] sm:$0xff]
        %v335 = vld [vmem:[#allocation2 + $0x78] sm:$0xff]
        %336 = vmatprep.subr.mxu0 0.0
        %337 = vmatpush1.msra.mxu0 %v320
        %338 = vmatprep.subr.mxu0 0.0
        %339 = vmatpush1.msra.mxu0 %v321
        %340 = vmatprep.subr.mxu0 0.0
        %341 = vmatpush1.msra.mxu0 %v322
        %342 = vmatprep.subr.mxu0 0.0
        %343 = vmatpush1.msra.mxu0 %v323
        %344 = vmatprep.subr.mxu0 0.0
        %345 = vmatpush1.msra.mxu0 %v324
        %346 = vmatprep.subr.mxu0 0.0
        %347 = vmatpush1.msra.mxu0 %v325
        %348 = vmatprep.subr.mxu0 0.0
        %349 = vmatpush1.msra.mxu0 %v326
        %350 = vmatprep.subr.mxu0 0.0
        %351 = vmatpush1.msra.mxu0 %v327
        %352 = vmatprep.subr.mxu0 0.0
        %353 = vmatpush1.msra.mxu0 %v328
        %354 = vmatprep.subr.mxu0 0.0
        %355 = vmatpush1.msra.mxu0 %v329
        %356 = vmatprep.subr.mxu0 0.0
        %357 = vmatpush1.msra.mxu0 %v330
        %358 = vmatprep.subr.mxu0 0.0
        %359 = vmatpush1.msra.mxu0 %v331
        %360 = vmatprep.subr.mxu0 0.0
        %361 = vmatpush1.msra.mxu0 %v332
        %362 = vmatprep.subr.mxu0 0.0
        %363 = vmatpush1.msra.mxu0 %v333
        %364 = vmatprep.subr.mxu0 0.0
        %365 = vmatpush1.msra.mxu0 %v334
        %366 = vmatprep.subr.mxu0 0.0
        %367 = vmatpush1.msra.mxu0 %v335
        %368 = vmatprep.subr.mxu0 0.0
        %369 = vmatpush1.msra.mxu0 0.0
        %370 = vmatprep.subr.mxu0 0.0
        %371 = vmatpush1.msra.mxu0 0.0
        %372 = vmatprep.subr.mxu0 0.0
        %373 = vmatpush1.msra.mxu0 0.0
        %374 = vmatprep.subr.mxu0 0.0
        %375 = vmatpush1.msra.mxu0 0.0
        %376 = vmatprep.subr.mxu0 0.0
        %377 = vmatpush1.msra.mxu0 0.0
        %378 = vmatprep.subr.mxu0 0.0
        %379 = vmatpush1.msra.mxu0 0.0
        %380 = vmatprep.subr.mxu0 0.0
        %381 = vmatpush1.msra.mxu0 0.0
        %382 = vmatprep.subr.mxu0 0.0
        %383 = vmatpush1.msra.mxu0 0.0
        %384 = vmatprep.subr.mxu0 0.0
        %385 = vmatpush1.msra.mxu0 0.0
        %386 = vmatprep.subr.mxu0 0.0
        %387 = vmatpush1.msra.mxu0 0.0
        %388 = vmatprep.subr.mxu0 0.0
        %389 = vmatpush1.msra.mxu0 0.0
        %390 = vmatprep.subr.mxu0 0.0
        %391 = vmatpush1.msra.mxu0 0.0
        %392 = vmatprep.subr.mxu0 0.0
        %393 = vmatpush1.msra.mxu0 0.0
        %394 = vmatprep.subr.mxu0 0.0
        %395 = vmatpush1.msra.mxu0 0.0
        %396 = vmatprep.subr.mxu0 0.0
        %397 = vmatpush1.msra.mxu0 0.0
        %398 = vmatprep.subr.mxu0 0.0
        %399 = vmatpush1.msra.mxu0 0.0
        %400 = vmatprep.mubr.f32.mxu0 0.0
        %401 = vmatmul.mubr.f32.gmra.mrb[0].mxu0 %v316
        %v402 = vpop.f32.mrb[0].mxu0
        %v403 = vadd.f32 0.0, %v402
        %v404 = vpop.f32.mrb[0].mxu0
        %405 = vmatprep.mubr.f32.mxu0 0.0
        %406 = vmatmul.mubr.f32.gmra.mrb[0].mxu0 %v317
        %v407 = vpop.f32.mrb[0].mxu0
        %v408 = vadd.f32 0.0, %v407
        %v409 = vpop.f32.mrb[0].mxu0
        %410 = vmatprep.mubr.f32.mxu0 0.0
        %411 = vmatmul.mubr.f32.gmra.mrb[0].mxu0 %v318
        %v412 = vpop.f32.mrb[0].mxu0
        %v413 = vadd.f32 0.0, %v412
        %v414 = vpop.f32.mrb[0].mxu0
        %415 = vmatprep.mubr.f32.mxu0 0.0
        %416 = vmatmul.mubr.f32.gmra.mrb[0].mxu0 %v319
        %v417 = vpop.f32.mrb[0].mxu0
        %v418 = vadd.f32 0.0, %v417
        %v419 = vpop.f32.mrb[0].mxu0
        %420 = vdwg.mxu0
        %v422 = vlaneseq
        %v423 = vshrl.u32 %v422, 7
        %v424 = vsub.s32 0, %v423
        %v425 = vrot.slane %v315, %v424
        %v427 = vadd.f32 %v425, %v403
        %v428 = vadd.f32 %v425, %v408
        %v429 = vadd.f32 %v425, %v413
        %v430 = vadd.f32 %v425, %v418
        %431 = vst [vmem:[%s294] sm:$0xff] %v427
        %432 = vst [vmem:[%s294 + $0x8] sm:$0xff] %v428
        %433 = vst [vmem:[%s294 + $0x10] sm:$0xff] %v429
        %434 = vst [vmem:[%s294 + $0x18] sm:$0xff] %v430
        %v435 = vld [vmem:[%s294] sm:$0xff]
        %v436 = vld [vmem:[%s294 + $0x8] sm:$0xff]
        %v437 = vld [vmem:[%s294 + $0x10] sm:$0xff]
        %v438 = vld [vmem:[%s294 + $0x18] sm:$0xff]
        %v439 = vld [vmem:[%s305] sm:$0xff]
        %v440 = vld [vmem:[%s305 + $0x8] sm:$0xff]
        %v441 = vld [vmem:[%s305 + $0x10] sm:$0xff]
        %v442 = vld [vmem:[%s305 + $0x18] sm:$0xff]
        %v443 = vld [vmem:[%s310] sm:$0xff]
        %v444 = vld [vmem:[%s310 + $0x8] sm:$0xff]
        %v445 = vld [vmem:[%s310 + $0x10] sm:$0xff]
        %v446 = vld [vmem:[%s310 + $0x18] sm:$0xff]
        %v447 = vld [vmem:[%s310 + $0x20] sm:$0xff]
        %v448 = vld [vmem:[%s310 + $0x28] sm:$0xff]
        %vm449 = vcmask 392192
        %v451 = vsel %vm449, %v439, 0
        %v454 = vsel %vm449, %v440, 0
        %v457 = vsel %vm449, %v441, 0
        %v460 = vsel %vm449, %v442, 0
        %462 = vmatprep.subr.mxu0 0.0
        %463 = vmatpush1.msra.mxu0 %v443
        %464 = vmatprep.subr.mxu0 0.0
        %465 = vmatpush1.msra.mxu0 %v444
        %466 = vmatprep.subr.mxu0 0.0
        %467 = vmatpush1.msra.mxu0 %v445
        %468 = vmatprep.subr.mxu0 0.0
        %469 = vmatpush1.msra.mxu0 %v446
        %470 = vmatprep.subr.mxu0 0.0
        %471 = vmatpush1.msra.mxu0 %v447
        %472 = vmatprep.subr.mxu0 0.0
        %473 = vmatpush1.msra.mxu0 %v448
        %474 = vmatprep.subr.mxu0 0.0
        %475 = vmatpush1.msra.mxu0 0.0
        %476 = vmatprep.subr.mxu0 0.0
        %477 = vmatpush1.msra.mxu0 0.0
        %478 = vmatprep.subr.mxu0 0.0
        %479 = vmatpush1.msra.mxu0 0.0
        %480 = vmatprep.subr.mxu0 0.0
        %481 = vmatpush1.msra.mxu0 0.0
        %482 = vmatprep.subr.mxu0 0.0
        %483 = vmatpush1.msra.mxu0 0.0
        %484 = vmatprep.subr.mxu0 0.0
        %485 = vmatpush1.msra.mxu0 0.0
        %486 = vmatprep.subr.mxu0 0.0
        %487 = vmatpush1.msra.mxu0 0.0
        %488 = vmatprep.subr.mxu0 0.0
        %489 = vmatpush1.msra.mxu0 0.0
        %490 = vmatprep.subr.mxu0 0.0
        %491 = vmatpush1.msra.mxu0 0.0
        %492 = vmatprep.subr.mxu0 0.0
        %493 = vmatpush1.msra.mxu0 0.0
        %494 = vmatprep.subr.mxu0 0.0
        %495 = vmatpush1.msra.mxu0 0.0
        %496 = vmatprep.subr.mxu0 0.0
        %497 = vmatpush1.msra.mxu0 0.0
        %498 = vmatprep.subr.mxu0 0.0
        %499 = vmatpush1.msra.mxu0 0.0
        %500 = vmatprep.subr.mxu0 0.0
        %501 = vmatpush1.msra.mxu0 0.0
        %502 = vmatprep.subr.mxu0 0.0
        %503 = vmatpush1.msra.mxu0 0.0
        %504 = vmatprep.subr.mxu0 0.0
        %505 = vmatpush1.msra.mxu0 0.0
        %506 = vmatprep.subr.mxu0 0.0
        %507 = vmatpush1.msra.mxu0 0.0
        %508 = vmatprep.subr.mxu0 0.0
        %509 = vmatpush1.msra.mxu0 0.0
        %510 = vmatprep.subr.mxu0 0.0
        %511 = vmatpush1.msra.mxu0 0.0
        %512 = vmatprep.subr.mxu0 0.0
        %513 = vmatpush1.msra.mxu0 0.0
        %514 = vmatprep.subr.mxu0 0.0
        %515 = vmatpush1.msra.mxu0 0.0
        %516 = vmatprep.subr.mxu0 0.0
        %517 = vmatpush1.msra.mxu0 0.0
        %518 = vmatprep.subr.mxu0 0.0
        %519 = vmatpush1.msra.mxu0 0.0
        %520 = vmatprep.subr.mxu0 0.0
        %521 = vmatpush1.msra.mxu0 0.0
        %522 = vmatprep.subr.mxu0 0.0
        %523 = vmatpush1.msra.mxu0 0.0
        %524 = vmatprep.subr.mxu0 0.0
        %525 = vmatpush1.msra.mxu0 0.0
        %526 = vmatprep.mubr.f32.mxu0 0.0
        %527 = vmatmul.mubr.f32.gmra.mrb[0].mxu0 %v451
        %v528 = vpop.f32.mrb[0].mxu0
        %v529 = vadd.f32 0.0, %v528
        %v530 = vpop.f32.mrb[0].mxu0
        %531 = vmatprep.mubr.f32.mxu0 0.0
        %532 = vmatmul.mubr.f32.gmra.mrb[0].mxu0 %v454
        %v533 = vpop.f32.mrb[0].mxu0
        %v534 = vadd.f32 0.0, %v533
        %v535 = vpop.f32.mrb[0].mxu0
        %536 = vmatprep.mubr.f32.mxu0 0.0
        %537 = vmatmul.mubr.f32.gmra.mrb[0].mxu0 %v457
        %v538 = vpop.f32.mrb[0].mxu0
        %v539 = vadd.f32 0.0, %v538
        %v540 = vpop.f32.mrb[0].mxu0
        %541 = vmatprep.mubr.f32.mxu0 0.0
        %542 = vmatmul.mubr.f32.gmra.mrb[0].mxu0 %v460
        %v543 = vpop.f32.mrb[0].mxu0
        %v544 = vadd.f32 0.0, %v543
        %v545 = vpop.f32.mrb[0].mxu0
        %546 = vdwg.mxu0
        %v547 = vadd.f32 %v435, %v529
        %v548 = vadd.f32 %v436, %v534
        %v549 = vadd.f32 %v437, %v539
        %v550 = vadd.f32 %v438, %v544
        %551 = vst [vmem:[%s294] sm:$0xff] %v547
        %552 = vst [vmem:[%s294 + $0x8] sm:$0xff] %v548
        %553 = vst [vmem:[%s294 + $0x10] sm:$0xff] %v549
        %554 = vst [vmem:[%s294 + $0x18] sm:$0xff] %v550
        %s555 = sand.u32 %s172, 1
        %s556 = scalar_lea.sflag [#allocation4], %s555
        %s557 = sand.u32 %s172, 1
        %s558 = smul.addr %s557, 32
        %s559 = scalar_lea.vmem [#allocation5], %s558
        // Predicated region
        $region45: #{tpu_custom_call.1} parent=39 // pred_check
          %p560 = pneg %p182
        $region46: #{tpu_custom_call.1} parent=39 // pred_check_branch
          %562 = sbr.rel (%p560) target = $region48
        $region47: #{tpu_custom_call.1} parent=39 // pred_region
          %s563 = smul.u32 4, %s24
          %s565 = ssub.s32 512, 512
          %566 = vsyncadd %s556, %s565
          %s567 = sadd.s32 %s25, %s563
          %s568 = smul.addr %s567, 128
          %s569 = scalar_lea.hbm %s5, %s568
          %s570 = sshll.u32 %s559, 4
          %s571 = int_to_ptr.vmem [resolvable:$true] %s570
          %576 = dma.vmem_to_hbm [thread:$0]  %s571, 512, %s569, %s556, 128, 128, 8
        $region48: #{tpu_custom_call.1} parent=39 // pred_fallthru
          _
      $region40: #{tpu_custom_call.1} parent=5 // pred_fallthru
        _
      %p577 = scmp.le.s32.totalorder 2, %s15
      // Predicated region
      $region49: #{tpu_custom_call.1} parent=5 // pred_check
        %p578 = pneg %p577
      $region50: #{tpu_custom_call.1} parent=5 // pred_check_branch
        %580 = sbr.rel (%p578) target = $region52
      $region51: #{tpu_custom_call.1} parent=5 // pred_region
        %s581 = ssub.s32 %s15, 2
        // Predicated region
        $region53: #{tpu_custom_call.1} parent=51 // pred_check
          %p582 = pneg %p188
        $region54: #{tpu_custom_call.1} parent=51 // pred_check_branch
          %584 = sbr.rel (%p582) target = $region56
        $region55: #{tpu_custom_call.1} parent=51 // pred_region
          %s585 = sand.u32 %s173, 1
          %s586 = scalar_lea.sflag [#allocation4], %s585
          %s587 = sand.u32 %s173, 1
          %s588 = smul.addr %s587, 32
          %s589 = scalar_lea.vmem [#allocation5], %s588
          %590 = dma.done %s586, 512
        $region56: #{tpu_custom_call.1} parent=51 // pred_fallthru
          _
      $region52: #{tpu_custom_call.1} parent=5 // pred_fallthru
        _
    $region6: #{tpu_custom_call.1} parent=1 // loop_footer
      %s19 = sadd.s32 1, %s15
    $region7: #{tpu_custom_call.1} parent=1 // loop_footer_branch
      %14 = sbr.rel target = $region3
    $region8: #{tpu_custom_call.1} parent=1 // loop_exit
      _
    %591 = vsyncpa [#allocation3], 1
    %s592 = scalar_lea.sflag [#allocation3], 1
    %593 = vsyncpa %s592, 1
    %594 = vsyncpa [#allocation4], 1
    %s595 = scalar_lea.sflag [#allocation4], 1
    %596 = vsyncpa %s595, 1

</llo_original>
